<compile_context>
chip_gen: v7x
topology: tpu7x:2x2x1
jax: 0.10.0
libtpu: 0.0.40
codegen_flags: <defaults>
</compile_context>

<pallas_src>
import functools

import jax
import jax.numpy as jnp
import numpy as np
from jax import lax
from jax.experimental import pallas as pl
from jax.experimental.pallas import tpu as pltpu

_ROWS = 8          # fill all 8 sublanes of every vreg
_CHUNK_C = 512     # inner-loop column chunk (4 vregs per operand)
_MAX_CHUNKS = 8    # cap block at 8 * 512 = 4096 cols = 32768 points / grid step


# ----------------------------------------------------------------------------
# Pallas kernel: nearest-segment squared distance + fused partial-sum reduce.
# ----------------------------------------------------------------------------
def _wall_term_kernel(seg_ref, xy_ref, *out_refs, num_segments, num_chunks,
                      compute_dist):
    if compute_dist:
        dist_ref, psum_ref = out_refs
    else:
        (psum_ref,) = out_refs

    def nearest_sq_dist(x, y):
        def seg_step(j, min_d2):
            base = j * 6
            bx = seg_ref[base + 0]
            by = seg_ref[base + 1]
            ax = seg_ref[base + 2]
            ay = seg_ref[base + 3]
            a2 = seg_ref[base + 4]       # |a|^2
            inv_a2 = seg_ref[base + 5]   # 1 / |a|^2
            cx = x - bx
            cy = y - by
            # Unscaled-dot form: overshoot ou = max(-c.a, c.a - |a|^2, 0);
            # d2 = (ou^2 + cross^2) / |a|^2.  Saves 2 VPU muls per segment
            # versus scaling the dot by 1/|a|^2 up front.
            dotu = cx * ax + cy * ay
            ou = jnp.maximum(jnp.maximum(-dotu, dotu - a2), 0.0)
            cross = cx * ay - cy * ax
            d2 = (ou * ou + cross * cross) * inv_a2
            return jnp.minimum(min_d2, d2)

        min_d2 = jnp.full(x.shape, jnp.inf, dtype=jnp.float32)
        if num_segments <= 16:
            # Small M: static unroll keeps everything in registers.
            for j in range(num_segments):
                min_d2 = seg_step(j, min_d2)
        else:
            # Large M: bounded unroll=8 gives the scheduler room to hide the
            # 6 SMEM scalar loads / segment under the VALU stream.
            min_d2 = lax.fori_loop(0, num_segments, seg_step, min_d2, unroll=8)
        return min_d2

    def chunk_body(c, acc):
        if isinstance(c, int):
            col = c * _CHUNK_C
        else:
            col = pl.multiple_of(c * _CHUNK_C, _CHUNK_C)
        x = xy_ref[0, 0, :, pl.ds(col, _CHUNK_C)]   # (_ROWS, _CHUNK_C)
        y = xy_ref[0, 1, :, pl.ds(col, _CHUNK_C)]
        min_d2 = nearest_sq_dist(x, y)
        if compute_dist:
            # sqrt hoisted out of the segment loop; EUP slot, off the VALU path.
            dist_ref[0, :, pl.ds(col, _CHUNK_C)] = jnp.sqrt(min_d2)
        # Fold the chunk to an (8, 128) partial sum with pure VPU adds over
        # vreg-aligned lane groups (no XLU reduce inside the kernel).
        part = min_d2[:, 0:128]
        for k in range(1, _CHUNK_C // 128):
            part = part + min_d2[:, k * 128:(k + 1) * 128]
        return acc + part

    acc = jnp.zeros((_ROWS, 128), jnp.float32)
    if num_chunks == 1:
        acc = chunk_body(0, acc)
    else:
        acc = lax.fori_loop(0, num_chunks, chunk_body, acc)
    psum_ref[0] = acc


def _choose_tile_c(n):
    """Pick the per-grid-step column count (multiple of _CHUNK_C).

    Big enough to amortize per-step pipeline overhead, but aiming for >= 2
    grid steps so the parallel grid axis can shard across both v7x TCs.
    """
    cols = -(-max(int(n), 1) // _ROWS)          # ceil(n / 8)
    cols_per_tile = -(-cols // 2)               # target >= 2 grid steps
    chunks = max(1, -(-cols_per_tile // _CHUNK_C))
    return int(min(chunks, _MAX_CHUNKS)) * _CHUNK_C


@functools.partial(jax.jit, static_argnames=("return_distances",))
def nearest_segment_distance_pallas(floorplan, pcd_2d, *, return_distances=True):
    """Returns (distances (N,) or None, mse_loss scalar)."""
    floorplan = floorplan.astype(jnp.float32)
    pcd_2d = pcd_2d.astype(jnp.float32)
    m = int(floorplan.shape[0])
    n = int(pcd_2d.shape[0])

    tile_c = _choose_tile_c(n)
    block_pts = _ROWS * tile_c
    num_tiles = max(1, -(-n // block_pts))
    n_pad = num_tiles * block_pts

    # Segment table [bx, by, ax, ay, |a|^2, 1/|a|^2] flattened to 1-D for SMEM.
    # TODO(synk): degenerate zero-length segments give inf/NaN here exactly as
    # in the PyTorch reference; the padded-lane-contributes-zero trick also
    # assumes segment 0 is non-degenerate.
    bias = floorplan[:, :2]
    direction = floorplan[:, 2:4] - floorplan[:, :2]
    a2 = jnp.sum(direction * direction, axis=-1)
    seg = jnp.stack([bias[:, 0], bias[:, 1], direction[:, 0], direction[:, 1],
                     a2, 1.0 / a2], axis=-1).reshape(-1)        # (6*M,)

    # Pad with an endpoint of segment 0 so padded points have distance exactly
    # 0 (no lane masks inside the kernel).  All of this runs under the same jit
    # as the pallas_call, so XLA fuses pad + pack into a single pass.
    x_flat = jnp.full((n_pad,), floorplan[0, 0], jnp.float32).at[:n].set(pcd_2d[:, 0])
    y_flat = jnp.full((n_pad,), floorplan[0, 1], jnp.float32).at[:n].set(pcd_2d[:, 1])
    xy = jnp.stack([x_flat.reshape(num_tiles, _ROWS, tile_c),
                    y_flat.reshape(num_tiles, _ROWS, tile_c)],
                   axis=1)                                      # (T, 2, 8, tile_c)

    kernel = functools.partial(_wall_term_kernel, num_segments=m,
                               num_chunks=tile_c // _CHUNK_C,
                               compute_dist=return_distances)

    out_shape = [jax.ShapeDtypeStruct((num_tiles, _ROWS, 128), jnp.float32)]
    out_specs = [pl.BlockSpec((1, _ROWS, 128), lambda i: (i, 0, 0))]
    if return_distances:
        out_shape.insert(0, jax.ShapeDtypeStruct((num_tiles, _ROWS, tile_c),
                                                 jnp.float32))
        out_specs.insert(0, pl.BlockSpec((1, _ROWS, tile_c), lambda i: (i, 0, 0)))

    outs = pl.pallas_call(
        kernel,
        out_shape=tuple(out_shape),
        grid_spec=pltpu.PrefetchScalarGridSpec(
            num_scalar_prefetch=0,
            grid=(num_tiles,),
            in_specs=[
                pl.BlockSpec(memory_space=pltpu.MemorySpace.SMEM),            # seg table
                pl.BlockSpec((1, 2, _ROWS, tile_c), lambda i: (i, 0, 0, 0)),  # packed x/y
            ],
            out_specs=tuple(out_specs),
        ),
        compiler_params=pltpu.CompilerParams(
            dimension_semantics=("parallel",)),   # fully parallel grid (megacore-ok)
    )(seg, xy)

    if return_distances:
        dist_pad, psum = outs
        distances = dist_pad.reshape(-1)[:n]
    else:
        psum = outs[0] if isinstance(outs, (tuple, list)) else outs
        distances = None

    loss = jnp.sum(psum) / jnp.float32(max(n, 1))
    return distances, loss


# ----------------------------------------------------------------------------
# Glue: pinhole unprojection (the `unproject` callable injected in the module).
# ----------------------------------------------------------------------------
def make_unproject(intrinsics, rotations, translations):
    # intrinsics: (C, 4) = fx, fy, cx, cy ; rotations: (C, 3, 3) ; translations: (C, 3)
    def unproject(depths, points, camera_idxs):
        fx = intrinsics[camera_idxs, 0]
        fy = intrinsics[camera_idxs, 1]
        cx = intrinsics[camera_idxs, 2]
        cy = intrinsics[camera_idxs, 3]
        u = points[:, 0]
        v = points[:, 1]
        xc = (u - cx) * depths / fx
        yc = (v - cy) * depths / fy
        cam = jnp.stack([xc, yc, depths], axis=-1)                  # (N, 3)
        r = rotations[camera_idxs]                                  # (N, 3, 3)
        t = translations[camera_idxs]                               # (N, 3)
        return jnp.einsum('nij,nj->ni', r, cam) + t                 # (N, 3) world pts
    return unproject


# ----------------------------------------------------------------------------
# Module-equivalent wrapper.
# ----------------------------------------------------------------------------
class WallTerm:
    """JAX/Pallas equivalent of facap's WallTerm (distance_function == MSE)."""
    # TODO(synk): the original module accepts an arbitrary `distance_function`
    # callable; only the MSE case is fused into the Pallas kernel here.
    # TODO(synk): no custom_vjp is defined; gradients need a backward kernel or
    # analytic VJP before use inside an optimizer.

    def __init__(self, wall, unproject_fn, floorplan):
        self.wall = wall
        self.unproject = unproject_fn
        self.floorplan = floorplan
        self._fwd = jax.jit(self._forward)   # unproject + pack + kernel under one jit

    def _forward(self, depths, points, camera_idxs, floorplan):
        wall_pcd = self.unproject(depths, points, camera_idxs)
        # Loss-only path: no per-point distance writeback to HBM.
        _, loss = nearest_segment_distance_pallas(
            floorplan, wall_pcd[:, :2], return_distances=False)
        return loss

    def __call__(self):
        return self._fwd(self.wall['depths'], self.wall['points'],
                         self.wall['camera_idxs'], self.floorplan)


# ----------------------------------------------------------------------------
# Pure-JAX reference for verification.
# ----------------------------------------------------------------------------
def nearest_segment_distance_ref(floorplan, pcd):
    b = floorplan[:, :2]                                  # (M, 2)
    a = floorplan[:, 2:] - floorplan[:, :2]               # (M, 2)
    c = pcd[None, :, :] - b[:, None, :]                   # (M, N, 2)
    a2 = jnp.sum(a * a, axis=-1)                          # (M,)
    dot = jnp.einsum('mnk,mk->mn', c, a) / a2[:, None]
    a_norm = jnp.sqrt(a2)
    par = jnp.where(dot < 0.0, -dot * a_norm[:, None],
                    jnp.where(dot > 1.0, (dot - 1.0) * a_norm[:, None], 0.0))
    ort = jnp.abs(c[..., 0] * a[:, None, 1] - c[..., 1] * a[:, None, 0]) / a_norm[:, None]
    d = jnp.sqrt(par ** 2 + ort ** 2)
    return jnp.min(d, axis=0)


if __name__ == "__main__":
    key = jax.random.PRNGKey(0)
    k1, k2, k3 = jax.random.split(key, 3)

    N, M, C = 200, 6, 3

    # Wall observations (the `wall` dict of the module).
    depths = jax.random.uniform(k1, (N,), jnp.float32, minval=0.5, maxval=3.0)
    points = jax.random.uniform(k2, (N, 2), jnp.float32, minval=0.0, maxval=64.0)
    camera_idxs = jax.random.randint(k3, (N,), 0, C)

    # Deterministic camera parameters.
    intrinsics = jnp.tile(jnp.array([[50.0, 50.0, 32.0, 32.0]], jnp.float32), (C, 1))
    angles = jnp.array([0.1, 0.7, 1.3], jnp.float32)
    ca, sa = jnp.cos(angles), jnp.sin(angles)
    z = jnp.zeros((C,), jnp.float32)
    o = jnp.ones((C,), jnp.float32)
    rotations = jnp.stack([
        jnp.stack([ca, -sa, z], axis=-1),
        jnp.stack([sa, ca, z], axis=-1),
        jnp.stack([z, z, o], axis=-1),
    ], axis=1)                                            # (C, 3, 3)
    translations = jnp.array([[0.0, 0.0, 0.0],
                              [1.0, -0.5, 0.2],
                              [-0.8, 0.6, -0.1]], jnp.float32)

    # Floorplan wall segments (x1, y1, x2, y2).
    floorplan = jnp.array([
        [-3.0, -3.0,  3.0, -3.0],
        [ 3.0, -3.0,  3.0,  1.0],
        [ 3.0,  1.0,  1.5,  3.0],
        [ 1.5,  3.0, -3.0,  3.0],
        [-3.0,  3.0, -3.0, -3.0],
        [-1.0, -1.0,  1.0,  1.0],
    ], jnp.float32)

    unproject = make_unproject(intrinsics, rotations, translations)
    wall = {"depths": depths, "points": points, "camera_idxs": camera_idxs}

    # Run the Pallas-backed WallTerm forward (loss-only path).
    term = WallTerm(wall, unproject, floorplan)
    loss = term()
    jax.block_until_ready(loss)

    # Verify against a pure-JAX reference (distances + loss path).
    wall_pcd = unproject(depths, points, camera_idxs)
    pcd_2d = wall_pcd[:, :2]
    dists, loss2 = nearest_segment_distance_pallas(floorplan, pcd_2d,
                                                   return_distances=True)
    jax.block_until_ready((dists, loss2))

    ref_d = nearest_segment_distance_ref(floorplan, pcd_2d)
    ref_loss = jnp.mean(ref_d ** 2)

    np.testing.assert_allclose(np.asarray(dists), np.asarray(ref_d),
                               rtol=1e-5, atol=1e-5)
    np.testing.assert_allclose(float(loss), float(ref_loss), rtol=1e-5, atol=1e-5)
    np.testing.assert_allclose(float(loss2), float(ref_loss), rtol=1e-5, atol=1e-5)

    print("KERNEL_OK")
</pallas_src>

<mosaic_0001>
module attributes {stable_mosaic.version = 11 : i64} {
  func.func @_wall_term_kernel(%arg0: i32, %arg1: memref<36xf32, #tpu.memory_space<smem>>, %arg2: memref<1x2x8x512xf32, #tpu.memory_space<vmem>>, %arg3: memref<1x8x128xf32, #tpu.memory_space<vmem>>) attributes {dimension_semantics = [#tpu.dimension_semantics<parallel>], iteration_bounds = array<i64: 1>, scalar_prefetch = 0 : i64, scratch_operands = 0 : i64, tpu.core_type = #tpu.core_type<tc>, window_params = [{transform_indices = @transform_0, window_bounds = array<i64: 36>}, {transform_indices = @transform_1, window_bounds = array<i64: 1, 2, 8, 512>}, {transform_indices = @transform_2, window_bounds = array<i64: 1, 8, 128>}]} {
    %cst = arith.constant 0.000000e+00 : f32
    %0 = vector.broadcast %cst : f32 to vector<8x128xf32>
    %c0 = arith.constant 0 : index
    %c0_0 = arith.constant 0 : index
    %c0_1 = arith.constant 0 : index
    %c0_2 = arith.constant 0 : index
    %1 = vector.load %arg2[%c0, %c0_0, %c0_1, %c0_2] : memref<1x2x8x512xf32, #tpu.memory_space<vmem>>, vector<1x1x8x512xf32>
    %2 = vector.shape_cast %1 : vector<1x1x8x512xf32> to vector<8x512xf32>
    %c0_3 = arith.constant 0 : index
    %c1 = arith.constant 1 : index
    %c0_4 = arith.constant 0 : index
    %c0_5 = arith.constant 0 : index
    %3 = vector.load %arg2[%c0_3, %c1, %c0_4, %c0_5] : memref<1x2x8x512xf32, #tpu.memory_space<vmem>>, vector<1x1x8x512xf32>
    %4 = vector.shape_cast %3 : vector<1x1x8x512xf32> to vector<8x512xf32>
    %cst_6 = arith.constant 0x7F800000 : f32
    %5 = vector.broadcast %cst_6 : f32 to vector<8x512xf32>
    %c0_7 = arith.constant 0 : index
    %6 = memref.load %arg1[%c0_7] : memref<36xf32, #tpu.memory_space<smem>>
    %c1_8 = arith.constant 1 : index
    %7 = memref.load %arg1[%c1_8] : memref<36xf32, #tpu.memory_space<smem>>
    %c2 = arith.constant 2 : index
    %8 = memref.load %arg1[%c2] : memref<36xf32, #tpu.memory_space<smem>>
    %c3 = arith.constant 3 : index
    %9 = memref.load %arg1[%c3] : memref<36xf32, #tpu.memory_space<smem>>
    %c4 = arith.constant 4 : index
    %10 = memref.load %arg1[%c4] : memref<36xf32, #tpu.memory_space<smem>>
    %c5 = arith.constant 5 : index
    %11 = memref.load %arg1[%c5] : memref<36xf32, #tpu.memory_space<smem>>
    %12 = vector.broadcast %6 : f32 to vector<8x512xf32>
    %13 = arith.subf %2, %12 : vector<8x512xf32>
    %14 = vector.broadcast %7 : f32 to vector<8x512xf32>
    %15 = arith.subf %4, %14 : vector<8x512xf32>
    %16 = vector.broadcast %8 : f32 to vector<8x512xf32>
    %17 = arith.mulf %13, %16 : vector<8x512xf32>
    %18 = vector.broadcast %9 : f32 to vector<8x512xf32>
    %19 = arith.mulf %15, %18 : vector<8x512xf32>
    %20 = arith.addf %17, %19 : vector<8x512xf32>
    %cst_9 = arith.constant 0.000000e+00 : f32
    %21 = vector.broadcast %cst_9 : f32 to vector<8x512xf32>
    %22 = arith.subf %21, %20 : vector<8x512xf32>
    %23 = vector.broadcast %10 : f32 to vector<8x512xf32>
    %24 = arith.subf %20, %23 : vector<8x512xf32>
    %25 = arith.maximumf %22, %24 : vector<8x512xf32>
    %cst_10 = arith.constant 0.000000e+00 : f32
    %26 = vector.broadcast %cst_10 : f32 to vector<8x512xf32>
    %27 = arith.maximumf %25, %26 : vector<8x512xf32>
    %28 = vector.broadcast %9 : f32 to vector<8x512xf32>
    %29 = arith.mulf %13, %28 : vector<8x512xf32>
    %30 = vector.broadcast %8 : f32 to vector<8x512xf32>
    %31 = arith.mulf %15, %30 : vector<8x512xf32>
    %32 = arith.subf %29, %31 : vector<8x512xf32>
    %33 = arith.mulf %27, %27 : vector<8x512xf32>
    %34 = arith.mulf %32, %32 : vector<8x512xf32>
    %35 = arith.addf %33, %34 : vector<8x512xf32>
    %36 = vector.broadcast %11 : f32 to vector<8x512xf32>
    %37 = arith.mulf %35, %36 : vector<8x512xf32>
    %38 = arith.minimumf %5, %37 : vector<8x512xf32>
    %c6 = arith.constant 6 : index
    %39 = memref.load %arg1[%c6] : memref<36xf32, #tpu.memory_space<smem>>
    %c7 = arith.constant 7 : index
    %40 = memref.load %arg1[%c7] : memref<36xf32, #tpu.memory_space<smem>>
    %c8 = arith.constant 8 : index
    %41 = memref.load %arg1[%c8] : memref<36xf32, #tpu.memory_space<smem>>
    %c9 = arith.constant 9 : index
    %42 = memref.load %arg1[%c9] : memref<36xf32, #tpu.memory_space<smem>>
    %c10 = arith.constant 10 : index
    %43 = memref.load %arg1[%c10] : memref<36xf32, #tpu.memory_space<smem>>
    %c11 = arith.constant 11 : index
    %44 = memref.load %arg1[%c11] : memref<36xf32, #tpu.memory_space<smem>>
    %45 = vector.broadcast %39 : f32 to vector<8x512xf32>
    %46 = arith.subf %2, %45 : vector<8x512xf32>
    %47 = vector.broadcast %40 : f32 to vector<8x512xf32>
    %48 = arith.subf %4, %47 : vector<8x512xf32>
    %49 = vector.broadcast %41 : f32 to vector<8x512xf32>
    %50 = arith.mulf %46, %49 : vector<8x512xf32>
    %51 = vector.broadcast %42 : f32 to vector<8x512xf32>
    %52 = arith.mulf %48, %51 : vector<8x512xf32>
    %53 = arith.addf %50, %52 : vector<8x512xf32>
    %cst_11 = arith.constant 0.000000e+00 : f32
    %54 = vector.broadcast %cst_11 : f32 to vector<8x512xf32>
    %55 = arith.subf %54, %53 : vector<8x512xf32>
    %56 = vector.broadcast %43 : f32 to vector<8x512xf32>
    %57 = arith.subf %53, %56 : vector<8x512xf32>
    %58 = arith.maximumf %55, %57 : vector<8x512xf32>
    %cst_12 = arith.constant 0.000000e+00 : f32
    %59 = vector.broadcast %cst_12 : f32 to vector<8x512xf32>
    %60 = arith.maximumf %58, %59 : vector<8x512xf32>
    %61 = vector.broadcast %42 : f32 to vector<8x512xf32>
    %62 = arith.mulf %46, %61 : vector<8x512xf32>
    %63 = vector.broadcast %41 : f32 to vector<8x512xf32>
    %64 = arith.mulf %48, %63 : vector<8x512xf32>
    %65 = arith.subf %62, %64 : vector<8x512xf32>
    %66 = arith.mulf %60, %60 : vector<8x512xf32>
    %67 = arith.mulf %65, %65 : vector<8x512xf32>
    %68 = arith.addf %66, %67 : vector<8x512xf32>
    %69 = vector.broadcast %44 : f32 to vector<8x512xf32>
    %70 = arith.mulf %68, %69 : vector<8x512xf32>
    %71 = arith.minimumf %38, %70 : vector<8x512xf32>
    %c12 = arith.constant 12 : index
    %72 = memref.load %arg1[%c12] : memref<36xf32, #tpu.memory_space<smem>>
    %c13 = arith.constant 13 : index
    %73 = memref.load %arg1[%c13] : memref<36xf32, #tpu.memory_space<smem>>
    %c14 = arith.constant 14 : index
    %74 = memref.load %arg1[%c14] : memref<36xf32, #tpu.memory_space<smem>>
    %c15 = arith.constant 15 : index
    %75 = memref.load %arg1[%c15] : memref<36xf32, #tpu.memory_space<smem>>
    %c16 = arith.constant 16 : index
    %76 = memref.load %arg1[%c16] : memref<36xf32, #tpu.memory_space<smem>>
    %c17 = arith.constant 17 : index
    %77 = memref.load %arg1[%c17] : memref<36xf32, #tpu.memory_space<smem>>
    %78 = vector.broadcast %72 : f32 to vector<8x512xf32>
    %79 = arith.subf %2, %78 : vector<8x512xf32>
    %80 = vector.broadcast %73 : f32 to vector<8x512xf32>
    %81 = arith.subf %4, %80 : vector<8x512xf32>
    %82 = vector.broadcast %74 : f32 to vector<8x512xf32>
    %83 = arith.mulf %79, %82 : vector<8x512xf32>
    %84 = vector.broadcast %75 : f32 to vector<8x512xf32>
    %85 = arith.mulf %81, %84 : vector<8x512xf32>
    %86 = arith.addf %83, %85 : vector<8x512xf32>
    %cst_13 = arith.constant 0.000000e+00 : f32
    %87 = vector.broadcast %cst_13 : f32 to vector<8x512xf32>
    %88 = arith.subf %87, %86 : vector<8x512xf32>
    %89 = vector.broadcast %76 : f32 to vector<8x512xf32>
    %90 = arith.subf %86, %89 : vector<8x512xf32>
    %91 = arith.maximumf %88, %90 : vector<8x512xf32>
    %cst_14 = arith.constant 0.000000e+00 : f32
    %92 = vector.broadcast %cst_14 : f32 to vector<8x512xf32>
    %93 = arith.maximumf %91, %92 : vector<8x512xf32>
    %94 = vector.broadcast %75 : f32 to vector<8x512xf32>
    %95 = arith.mulf %79, %94 : vector<8x512xf32>
    %96 = vector.broadcast %74 : f32 to vector<8x512xf32>
    %97 = arith.mulf %81, %96 : vector<8x512xf32>
    %98 = arith.subf %95, %97 : vector<8x512xf32>
    %99 = arith.mulf %93, %93 : vector<8x512xf32>
    %100 = arith.mulf %98, %98 : vector<8x512xf32>
    %101 = arith.addf %99, %100 : vector<8x512xf32>
    %102 = vector.broadcast %77 : f32 to vector<8x512xf32>
    %103 = arith.mulf %101, %102 : vector<8x512xf32>
    %104 = arith.minimumf %71, %103 : vector<8x512xf32>
    %c18 = arith.constant 18 : index
    %105 = memref.load %arg1[%c18] : memref<36xf32, #tpu.memory_space<smem>>
    %c19 = arith.constant 19 : index
    %106 = memref.load %arg1[%c19] : memref<36xf32, #tpu.memory_space<smem>>
    %c20 = arith.constant 20 : index
    %107 = memref.load %arg1[%c20] : memref<36xf32, #tpu.memory_space<smem>>
    %c21 = arith.constant 21 : index
    %108 = memref.load %arg1[%c21] : memref<36xf32, #tpu.memory_space<smem>>
    %c22 = arith.constant 22 : index
    %109 = memref.load %arg1[%c22] : memref<36xf32, #tpu.memory_space<smem>>
    %c23 = arith.constant 23 : index
    %110 = memref.load %arg1[%c23] : memref<36xf32, #tpu.memory_space<smem>>
    %111 = vector.broadcast %105 : f32 to vector<8x512xf32>
    %112 = arith.subf %2, %111 : vector<8x512xf32>
    %113 = vector.broadcast %106 : f32 to vector<8x512xf32>
    %114 = arith.subf %4, %113 : vector<8x512xf32>
    %115 = vector.broadcast %107 : f32 to vector<8x512xf32>
    %116 = arith.mulf %112, %115 : vector<8x512xf32>
    %117 = vector.broadcast %108 : f32 to vector<8x512xf32>
    %118 = arith.mulf %114, %117 : vector<8x512xf32>
    %119 = arith.addf %116, %118 : vector<8x512xf32>
    %cst_15 = arith.constant 0.000000e+00 : f32
    %120 = vector.broadcast %cst_15 : f32 to vector<8x512xf32>
    %121 = arith.subf %120, %119 : vector<8x512xf32>
    %122 = vector.broadcast %109 : f32 to vector<8x512xf32>
    %123 = arith.subf %119, %122 : vector<8x512xf32>
    %124 = arith.maximumf %121, %123 : vector<8x512xf32>
    %cst_16 = arith.constant 0.000000e+00 : f32
    %125 = vector.broadcast %cst_16 : f32 to vector<8x512xf32>
    %126 = arith.maximumf %124, %125 : vector<8x512xf32>
    %127 = vector.broadcast %108 : f32 to vector<8x512xf32>
    %128 = arith.mulf %112, %127 : vector<8x512xf32>
    %129 = vector.broadcast %107 : f32 to vector<8x512xf32>
    %130 = arith.mulf %114, %129 : vector<8x512xf32>
    %131 = arith.subf %128, %130 : vector<8x512xf32>
    %132 = arith.mulf %126, %126 : vector<8x512xf32>
    %133 = arith.mulf %131, %131 : vector<8x512xf32>
    %134 = arith.addf %132, %133 : vector<8x512xf32>
    %135 = vector.broadcast %110 : f32 to vector<8x512xf32>
    %136 = arith.mulf %134, %135 : vector<8x512xf32>
    %137 = arith.minimumf %104, %136 : vector<8x512xf32>
    %c24 = arith.constant 24 : index
    %138 = memref.load %arg1[%c24] : memref<36xf32, #tpu.memory_space<smem>>
    %c25 = arith.constant 25 : index
    %139 = memref.load %arg1[%c25] : memref<36xf32, #tpu.memory_space<smem>>
    %c26 = arith.constant 26 : index
    %140 = memref.load %arg1[%c26] : memref<36xf32, #tpu.memory_space<smem>>
    %c27 = arith.constant 27 : index
    %141 = memref.load %arg1[%c27] : memref<36xf32, #tpu.memory_space<smem>>
    %c28 = arith.constant 28 : index
    %142 = memref.load %arg1[%c28] : memref<36xf32, #tpu.memory_space<smem>>
    %c29 = arith.constant 29 : index
    %143 = memref.load %arg1[%c29] : memref<36xf32, #tpu.memory_space<smem>>
    %144 = vector.broadcast %138 : f32 to vector<8x512xf32>
    %145 = arith.subf %2, %144 : vector<8x512xf32>
    %146 = vector.broadcast %139 : f32 to vector<8x512xf32>
    %147 = arith.subf %4, %146 : vector<8x512xf32>
    %148 = vector.broadcast %140 : f32 to vector<8x512xf32>
    %149 = arith.mulf %145, %148 : vector<8x512xf32>
    %150 = vector.broadcast %141 : f32 to vector<8x512xf32>
    %151 = arith.mulf %147, %150 : vector<8x512xf32>
    %152 = arith.addf %149, %151 : vector<8x512xf32>
    %cst_17 = arith.constant 0.000000e+00 : f32
    %153 = vector.broadcast %cst_17 : f32 to vector<8x512xf32>
    %154 = arith.subf %153, %152 : vector<8x512xf32>
    %155 = vector.broadcast %142 : f32 to vector<8x512xf32>
    %156 = arith.subf %152, %155 : vector<8x512xf32>
    %157 = arith.maximumf %154, %156 : vector<8x512xf32>
    %cst_18 = arith.constant 0.000000e+00 : f32
    %158 = vector.broadcast %cst_18 : f32 to vector<8x512xf32>
    %159 = arith.maximumf %157, %158 : vector<8x512xf32>
    %160 = vector.broadcast %141 : f32 to vector<8x512xf32>
    %161 = arith.mulf %145, %160 : vector<8x512xf32>
    %162 = vector.broadcast %140 : f32 to vector<8x512xf32>
    %163 = arith.mulf %147, %162 : vector<8x512xf32>
    %164 = arith.subf %161, %163 : vector<8x512xf32>
    %165 = arith.mulf %159, %159 : vector<8x512xf32>
    %166 = arith.mulf %164, %164 : vector<8x512xf32>
    %167 = arith.addf %165, %166 : vector<8x512xf32>
    %168 = vector.broadcast %143 : f32 to vector<8x512xf32>
    %169 = arith.mulf %167, %168 : vector<8x512xf32>
    %170 = arith.minimumf %137, %169 : vector<8x512xf32>
    %c30 = arith.constant 30 : index
    %171 = memref.load %arg1[%c30] : memref<36xf32, #tpu.memory_space<smem>>
    %c31 = arith.constant 31 : index
    %172 = memref.load %arg1[%c31] : memref<36xf32, #tpu.memory_space<smem>>
    %c32 = arith.constant 32 : index
    %173 = memref.load %arg1[%c32] : memref<36xf32, #tpu.memory_space<smem>>
    %c33 = arith.constant 33 : index
    %174 = memref.load %arg1[%c33] : memref<36xf32, #tpu.memory_space<smem>>
    %c34 = arith.constant 34 : index
    %175 = memref.load %arg1[%c34] : memref<36xf32, #tpu.memory_space<smem>>
    %c35 = arith.constant 35 : index
    %176 = memref.load %arg1[%c35] : memref<36xf32, #tpu.memory_space<smem>>
    %177 = vector.broadcast %171 : f32 to vector<8x512xf32>
    %178 = arith.subf %2, %177 : vector<8x512xf32>
    %179 = vector.broadcast %172 : f32 to vector<8x512xf32>
    %180 = arith.subf %4, %179 : vector<8x512xf32>
    %181 = vector.broadcast %173 : f32 to vector<8x512xf32>
    %182 = arith.mulf %178, %181 : vector<8x512xf32>
    %183 = vector.broadcast %174 : f32 to vector<8x512xf32>
    %184 = arith.mulf %180, %183 : vector<8x512xf32>
    %185 = arith.addf %182, %184 : vector<8x512xf32>
    %cst_19 = arith.constant 0.000000e+00 : f32
    %186 = vector.broadcast %cst_19 : f32 to vector<8x512xf32>
    %187 = arith.subf %186, %185 : vector<8x512xf32>
    %188 = vector.broadcast %175 : f32 to vector<8x512xf32>
    %189 = arith.subf %185, %188 : vector<8x512xf32>
    %190 = arith.maximumf %187, %189 : vector<8x512xf32>
    %cst_20 = arith.constant 0.000000e+00 : f32
    %191 = vector.broadcast %cst_20 : f32 to vector<8x512xf32>
    %192 = arith.maximumf %190, %191 : vector<8x512xf32>
    %193 = vector.broadcast %174 : f32 to vector<8x512xf32>
    %194 = arith.mulf %178, %193 : vector<8x512xf32>
    %195 = vector.broadcast %173 : f32 to vector<8x512xf32>
    %196 = arith.mulf %180, %195 : vector<8x512xf32>
    %197 = arith.subf %194, %196 : vector<8x512xf32>
    %198 = arith.mulf %192, %192 : vector<8x512xf32>
    %199 = arith.mulf %197, %197 : vector<8x512xf32>
    %200 = arith.addf %198, %199 : vector<8x512xf32>
    %201 = vector.broadcast %176 : f32 to vector<8x512xf32>
    %202 = arith.mulf %200, %201 : vector<8x512xf32>
    %203 = arith.minimumf %170, %202 : vector<8x512xf32>
    %204 = vector.extract_strided_slice %203 {offsets = [0, 0], sizes = [8, 128], strides = [1, 1]} : vector<8x512xf32> to vector<8x128xf32>
    %205 = vector.extract_strided_slice %203 {offsets = [0, 128], sizes = [8, 128], strides = [1, 1]} : vector<8x512xf32> to vector<8x128xf32>
    %206 = arith.addf %204, %205 : vector<8x128xf32>
    %207 = vector.extract_strided_slice %203 {offsets = [0, 256], sizes = [8, 128], strides = [1, 1]} : vector<8x512xf32> to vector<8x128xf32>
    %208 = arith.addf %206, %207 : vector<8x128xf32>
    %209 = vector.extract_strided_slice %203 {offsets = [0, 384], sizes = [8, 128], strides = [1, 1]} : vector<8x512xf32> to vector<8x128xf32>
    %210 = arith.addf %208, %209 : vector<8x128xf32>
    %211 = arith.addf %0, %210 : vector<8x128xf32>
    %c0_21 = arith.constant 0 : index
    %c0_22 = arith.constant 0 : index
    %c0_23 = arith.constant 0 : index
    %212 = vector.load %arg3[%c0_21, %c0_22, %c0_23] : memref<1x8x128xf32, #tpu.memory_space<vmem>>, vector<1x8x128xf32>
    %213 = vector.shape_cast %212 : vector<1x8x128xf32> to vector<8x128xf32>
    %214 = vector.shape_cast %211 : vector<8x128xf32> to vector<1x8x128xf32>
    tpu.vector_store %arg3[%c0_21, %c0_22, %c0_23], %214 {strides = array<i32>} : memref<1x8x128xf32, #tpu.memory_space<vmem>>, vector<1x8x128xf32>,
    return
  }
  func.func @transform_0(%arg0: i32) -> i32 {
    %c0_i32 = arith.constant 0 : i32
    %c0_i32_0 = arith.constant 0 : i32
    return %c0_i32 : i32
  }
  func.func @transform_1(%arg0: i32) -> (i32, i32, i32, i32) {
    %c0_i32 = arith.constant 0 : i32
    %c0_i32_0 = arith.constant 0 : i32
    %c0_i32_1 = arith.constant 0 : i32
    %c0_i32_2 = arith.constant 0 : i32
    return %arg0, %c0_i32, %c0_i32_0, %c0_i32_1 : i32, i32, i32, i32
  }
  func.func @transform_2(%arg0: i32) -> (i32, i32, i32) {
    %c0_i32 = arith.constant 0 : i32
    %c0_i32_0 = arith.constant 0 : i32
    %c0_i32_1 = arith.constant 0 : i32
    return %arg0, %c0_i32, %c0_i32_0 : i32, i32, i32
  }
}

</mosaic_0001>

<llo_original>
// kernel: nearest_segment_distance_pallas.1
$region0: #{nearest_segment_distance_pallas.1}
  #allocation0 [shape = 'u32[]', space=smem, size = 0x4, offset = 0x4, fixed_abs, tag = 'smem constant byte address 0x4 - core index']
  #allocation1 [shape = 'u32[144,128]{1,0:T(1,128)}', space=vmem, size = 0x12000, scoped, tag = 'internal scratch']
  %s0 = inlined_call_operand.vmem [shape: f32[36], index: 0, kind: input, shape index: {}]
  %s1 = inlined_call_operand.vmem [shape: f32[1,2,8,512], index: 1, kind: input, shape index: {}]
  %s2 = inlined_call_operand.vmem [shape: f32[1,8,128], index: 2, kind: output, shape index: {}]
  %s3 = sld [smem:[#allocation0]]
  $region22: #{nearest_segment_distance_pallas.1} parent=0
    _
  %s5 = ssub.s32 1, %s3
  %s6 = scalar_select 0, %s5, %s3
  $region1: #{nearest_segment_distance_pallas.1} parent=0
    #allocation2 [shape = 'u8[512]{0}', space=smem, size = 0x200, scoped, tag = 'input window, operand 0, single buffered']
    #allocation3 [shape = 's32[1]{0}', space=sflag, size = 0x4, scoped, tag = 'scoped memory for nearest_segment_distance_pallas.1']
    %7 = vsyncpa [#allocation3], 0
    // Predicated region
    $region2: #{nearest_segment_distance_pallas.1} parent=1 // pred_check
      _
    $region3: #{nearest_segment_distance_pallas.1} parent=1 // pred_check_branch
      %9 = sbr.rel (0) target = $region5
    $region4: #{nearest_segment_distance_pallas.1} parent=1 // pred_region
      %s11 = ssub.s32 16, 16
      %12 = vsyncadd [#allocation3], %s11
      %s14 = sshll.u32 %s0, 4
      %s15 = int_to_ptr.vmem [resolvable:$true] %s14
      %17 = dma.vmem_to_smem %s15, 16, [#allocation2], [#allocation3]
    $region5: #{nearest_segment_distance_pallas.1} parent=1 // pred_fallthru
      _
    // Predicated region
    $region6: #{nearest_segment_distance_pallas.1} parent=1 // pred_check
      _
    $region7: #{nearest_segment_distance_pallas.1} parent=1 // pred_check_branch
      %19 = sbr.rel (0) target = $region9
    $region8: #{nearest_segment_distance_pallas.1} parent=1 // pred_region
      _
    $region9: #{nearest_segment_distance_pallas.1} parent=1 // pred_fallthru
      _
    // Predicated region
    $region10: #{nearest_segment_distance_pallas.1} parent=1 // pred_check
      _
    $region11: #{nearest_segment_distance_pallas.1} parent=1 // pred_check_branch
      %21 = sbr.rel (0) target = $region13
    $region12: #{nearest_segment_distance_pallas.1} parent=1 // pred_region
      %22 = dma.done [#allocation3], 16
    $region13: #{nearest_segment_distance_pallas.1} parent=1 // pred_fallthru
      _
    %23 = sfence
    %v24 = vld [vmem:[%s1] sm:$0xff]
    %v25 = vld [vmem:[%s1 + $0x8] sm:$0xff]
    %v26 = vld [vmem:[%s1 + $0x10] sm:$0xff]
    %v27 = vld [vmem:[%s1 + $0x18] sm:$0xff]
    %s28 = scalar_lea.vmem %s1, 32
    %v29 = vld [vmem:[%s28] sm:$0xff]
    %v30 = vld [vmem:[%s28 + $0x8] sm:$0xff]
    %v31 = vld [vmem:[%s28 + $0x10] sm:$0xff]
    %v32 = vld [vmem:[%s28 + $0x18] sm:$0xff]
    %s33 = sld [smem:[#allocation2]]
    %s34 = sld [smem:[#allocation2 + $0x1]]
    %s35 = sld [smem:[#allocation2 + $0x2]]
    %s36 = sld [smem:[#allocation2 + $0x3]]
    %s37 = sld [smem:[#allocation2 + $0x4]]
    %s38 = sld [smem:[#allocation2 + $0x5]]
    %v39 = vstv %s33
    %v40 = vsub.f32 %v24, %v39
    %v41 = vsub.f32 %v25, %v39
    %v42 = vsub.f32 %v26, %v39
    %v43 = vsub.f32 %v27, %v39
    %v44 = vstv %s34
    %v45 = vsub.f32 %v29, %v44
    %v46 = vsub.f32 %v30, %v44
    %v47 = vsub.f32 %v31, %v44
    %v48 = vsub.f32 %v32, %v44
    %v49 = vstv %s35
    %v50 = vmul.f32 %v40, %v49
    %v51 = vmul.f32 %v41, %v49
    %v52 = vmul.f32 %v42, %v49
    %v53 = vmul.f32 %v43, %v49
    %v54 = vstv %s36
    %v55 = vmul.f32 %v45, %v54
    %v56 = vmul.f32 %v46, %v54
    %v57 = vmul.f32 %v47, %v54
    %v58 = vmul.f32 %v48, %v54
    %v59 = vadd.f32 %v50, %v55
    %v60 = vadd.f32 %v51, %v56
    %v61 = vadd.f32 %v52, %v57
    %v62 = vadd.f32 %v53, %v58
    %v63 = vsub.f32 0.0, %v59
    %v64 = vsub.f32 0.0, %v60
    %v65 = vsub.f32 0.0, %v61
    %v66 = vsub.f32 0.0, %v62
    %v67 = vstv %s37
    %v68 = vsub.f32 %v59, %v67
    %v69 = vsub.f32 %v60, %v67
    %v70 = vsub.f32 %v61, %v67
    %v71 = vsub.f32 %v62, %v67
    %v72 = vmax.f32 %v63, %v68
    %v73 = vmax.f32 %v64, %v69
    %v74 = vmax.f32 %v65, %v70
    %v75 = vmax.f32 %v66, %v71
    %v76 = vmax.f32 %v72, 0.0
    %v77 = vmax.f32 %v73, 0.0
    %v78 = vmax.f32 %v74, 0.0
    %v79 = vmax.f32 %v75, 0.0
    %v80 = vmul.f32 %v40, %v54
    %v81 = vmul.f32 %v41, %v54
    %v82 = vmul.f32 %v42, %v54
    %v83 = vmul.f32 %v43, %v54
    %v84 = vmul.f32 %v45, %v49
    %v85 = vmul.f32 %v46, %v49
    %v86 = vmul.f32 %v47, %v49
    %v87 = vmul.f32 %v48, %v49
    %v88 = vsub.f32 %v80, %v84
    %v89 = vsub.f32 %v81, %v85
    %v90 = vsub.f32 %v82, %v86
    %v91 = vsub.f32 %v83, %v87
    %v92 = vmul.f32 %v76, %v76
    %v93 = vmul.f32 %v77, %v77
    %v94 = vmul.f32 %v78, %v78
    %v95 = vmul.f32 %v79, %v79
    %v96 = vmul.f32 %v88, %v88
    %v97 = vmul.f32 %v89, %v89
    %v98 = vmul.f32 %v90, %v90
    %v99 = vmul.f32 %v91, %v91
    %v100 = vadd.f32 %v92, %v96
    %v101 = vadd.f32 %v93, %v97
    %v102 = vadd.f32 %v94, %v98
    %v103 = vadd.f32 %v95, %v99
    %v104 = vstv %s38
    %v105 = vmul.f32 %v100, %v104
    %v106 = vmul.f32 %v101, %v104
    %v107 = vmul.f32 %v102, %v104
    %v108 = vmul.f32 %v103, %v104
    %s109 = sld [smem:[#allocation2 + $0x6]]
    %s110 = sld [smem:[#allocation2 + $0x7]]
    %s111 = sld [smem:[#allocation2 + $0x8]]
    %s112 = sld [smem:[#allocation2 + $0x9]]
    %s113 = sld [smem:[#allocation2 + $0xa]]
    %s114 = sld [smem:[#allocation2 + $0xb]]
    %v115 = vstv %s109
    %v116 = vsub.f32 %v24, %v115
    %v117 = vsub.f32 %v25, %v115
    %v118 = vsub.f32 %v26, %v115
    %v119 = vsub.f32 %v27, %v115
    %v120 = vstv %s110
    %v121 = vsub.f32 %v29, %v120
    %v122 = vsub.f32 %v30, %v120
    %v123 = vsub.f32 %v31, %v120
    %v124 = vsub.f32 %v32, %v120
    %v125 = vstv %s111
    %v126 = vmul.f32 %v116, %v125
    %v127 = vmul.f32 %v117, %v125
    %v128 = vmul.f32 %v118, %v125
    %v129 = vmul.f32 %v119, %v125
    %v130 = vstv %s112
    %v131 = vmul.f32 %v121, %v130
    %v132 = vmul.f32 %v122, %v130
    %v133 = vmul.f32 %v123, %v130
    %v134 = vmul.f32 %v124, %v130
    %v135 = vadd.f32 %v126, %v131
    %v136 = vadd.f32 %v127, %v132
    %v137 = vadd.f32 %v128, %v133
    %v138 = vadd.f32 %v129, %v134
    %v139 = vsub.f32 0.0, %v135
    %v140 = vsub.f32 0.0, %v136
    %v141 = vsub.f32 0.0, %v137
    %v142 = vsub.f32 0.0, %v138
    %v143 = vstv %s113
    %v144 = vsub.f32 %v135, %v143
    %v145 = vsub.f32 %v136, %v143
    %v146 = vsub.f32 %v137, %v143
    %v147 = vsub.f32 %v138, %v143
    %v148 = vmax.f32 %v139, %v144
    %v149 = vmax.f32 %v140, %v145
    %v150 = vmax.f32 %v141, %v146
    %v151 = vmax.f32 %v142, %v147
    %v152 = vmax.f32 %v148, 0.0
    %v153 = vmax.f32 %v149, 0.0
    %v154 = vmax.f32 %v150, 0.0
    %v155 = vmax.f32 %v151, 0.0
    %v156 = vmul.f32 %v116, %v130
    %v157 = vmul.f32 %v117, %v130
    %v158 = vmul.f32 %v118, %v130
    %v159 = vmul.f32 %v119, %v130
    %v160 = vmul.f32 %v121, %v125
    %v161 = vmul.f32 %v122, %v125
    %v162 = vmul.f32 %v123, %v125
    %v163 = vmul.f32 %v124, %v125
    %v164 = vsub.f32 %v156, %v160
    %v165 = vsub.f32 %v157, %v161
    %v166 = vsub.f32 %v158, %v162
    %v167 = vsub.f32 %v159, %v163
    %v168 = vmul.f32 %v152, %v152
    %v169 = vmul.f32 %v153, %v153
    %v170 = vmul.f32 %v154, %v154
    %v171 = vmul.f32 %v155, %v155
    %v172 = vmul.f32 %v164, %v164
    %v173 = vmul.f32 %v165, %v165
    %v174 = vmul.f32 %v166, %v166
    %v175 = vmul.f32 %v167, %v167
    %v176 = vadd.f32 %v168, %v172
    %v177 = vadd.f32 %v169, %v173
    %v178 = vadd.f32 %v170, %v174
    %v179 = vadd.f32 %v171, %v175
    %v180 = vstv %s114
    %v181 = vmul.f32 %v176, %v180
    %v182 = vmul.f32 %v177, %v180
    %v183 = vmul.f32 %v178, %v180
    %v184 = vmul.f32 %v179, %v180
    %v185 = vmin.f32 %v105, %v181
    %v186 = vmin.f32 %v106, %v182
    %v187 = vmin.f32 %v107, %v183
    %v188 = vmin.f32 %v108, %v184
    %s189 = sld [smem:[#allocation2 + $0xc]]
    %s190 = sld [smem:[#allocation2 + $0xd]]
    %s191 = sld [smem:[#allocation2 + $0xe]]
    %s192 = sld [smem:[#allocation2 + $0xf]]
    %s193 = sld [smem:[#allocation2 + $0x10]]
    %s194 = sld [smem:[#allocation2 + $0x11]]
    %v195 = vstv %s189
    %v196 = vsub.f32 %v24, %v195
    %v197 = vsub.f32 %v25, %v195
    %v198 = vsub.f32 %v26, %v195
    %v199 = vsub.f32 %v27, %v195
    %v200 = vstv %s190
    %v201 = vsub.f32 %v29, %v200
    %v202 = vsub.f32 %v30, %v200
    %v203 = vsub.f32 %v31, %v200
    %v204 = vsub.f32 %v32, %v200
    %v205 = vstv %s191
    %v206 = vmul.f32 %v196, %v205
    %v207 = vmul.f32 %v197, %v205
    %v208 = vmul.f32 %v198, %v205
    %v209 = vmul.f32 %v199, %v205
    %v210 = vstv %s192
    %v211 = vmul.f32 %v201, %v210
    %v212 = vmul.f32 %v202, %v210
    %v213 = vmul.f32 %v203, %v210
    %v214 = vmul.f32 %v204, %v210
    %v215 = vadd.f32 %v206, %v211
    %v216 = vadd.f32 %v207, %v212
    %v217 = vadd.f32 %v208, %v213
    %v218 = vadd.f32 %v209, %v214
    %v219 = vsub.f32 0.0, %v215
    %v220 = vsub.f32 0.0, %v216
    %v221 = vsub.f32 0.0, %v217
    %v222 = vsub.f32 0.0, %v218
    %v223 = vstv %s193
    %v224 = vsub.f32 %v215, %v223
    %v225 = vsub.f32 %v216, %v223
    %v226 = vsub.f32 %v217, %v223
    %v227 = vsub.f32 %v218, %v223
    %v228 = vmax.f32 %v219, %v224
    %v229 = vmax.f32 %v220, %v225
    %v230 = vmax.f32 %v221, %v226
    %v231 = vmax.f32 %v222, %v227
    %v232 = vmax.f32 %v228, 0.0
    %v233 = vmax.f32 %v229, 0.0
    %v234 = vmax.f32 %v230, 0.0
    %v235 = vmax.f32 %v231, 0.0
    %v236 = vmul.f32 %v196, %v210
    %v237 = vmul.f32 %v197, %v210
    %v238 = vmul.f32 %v198, %v210
    %v239 = vmul.f32 %v199, %v210
    %v240 = vmul.f32 %v201, %v205
    %v241 = vmul.f32 %v202, %v205
    %v242 = vmul.f32 %v203, %v205
    %v243 = vmul.f32 %v204, %v205
    %v244 = vsub.f32 %v236, %v240
    %v245 = vsub.f32 %v237, %v241
    %v246 = vsub.f32 %v238, %v242
    %v247 = vsub.f32 %v239, %v243
    %v248 = vmul.f32 %v232, %v232
    %v249 = vmul.f32 %v233, %v233
    %v250 = vmul.f32 %v234, %v234
    %v251 = vmul.f32 %v235, %v235
    %v252 = vmul.f32 %v244, %v244
    %v253 = vmul.f32 %v245, %v245
    %v254 = vmul.f32 %v246, %v246
    %v255 = vmul.f32 %v247, %v247
    %v256 = vadd.f32 %v248, %v252
    %v257 = vadd.f32 %v249, %v253
    %v258 = vadd.f32 %v250, %v254
    %v259 = vadd.f32 %v251, %v255
    %v260 = vstv %s194
    %v261 = vmul.f32 %v256, %v260
    %v262 = vmul.f32 %v257, %v260
    %v263 = vmul.f32 %v258, %v260
    %v264 = vmul.f32 %v259, %v260
    %v265 = vmin.f32 %v185, %v261
    %v266 = vmin.f32 %v186, %v262
    %v267 = vmin.f32 %v187, %v263
    %v268 = vmin.f32 %v188, %v264
    %s269 = sld [smem:[#allocation2 + $0x12]]
    %s270 = sld [smem:[#allocation2 + $0x13]]
    %s271 = sld [smem:[#allocation2 + $0x14]]
    %s272 = sld [smem:[#allocation2 + $0x15]]
    %s273 = sld [smem:[#allocation2 + $0x16]]
    %s274 = sld [smem:[#allocation2 + $0x17]]
    %v275 = vstv %s269
    %v276 = vsub.f32 %v24, %v275
    %v277 = vsub.f32 %v25, %v275
    %v278 = vsub.f32 %v26, %v275
    %v279 = vsub.f32 %v27, %v275
    %v280 = vstv %s270
    %v281 = vsub.f32 %v29, %v280
    %v282 = vsub.f32 %v30, %v280
    %v283 = vsub.f32 %v31, %v280
    %v284 = vsub.f32 %v32, %v280
    %v285 = vstv %s271
    %v286 = vmul.f32 %v276, %v285
    %v287 = vmul.f32 %v277, %v285
    %v288 = vmul.f32 %v278, %v285
    %v289 = vmul.f32 %v279, %v285
    %v290 = vstv %s272
    %v291 = vmul.f32 %v281, %v290
    %v292 = vmul.f32 %v282, %v290
    %v293 = vmul.f32 %v283, %v290
    %v294 = vmul.f32 %v284, %v290
    %v295 = vadd.f32 %v286, %v291
    %v296 = vadd.f32 %v287, %v292
    %v297 = vadd.f32 %v288, %v293
    %v298 = vadd.f32 %v289, %v294
    %v299 = vsub.f32 0.0, %v295
    %v300 = vsub.f32 0.0, %v296
    %v301 = vsub.f32 0.0, %v297
    %v302 = vsub.f32 0.0, %v298
    %v303 = vstv %s273
    %v304 = vsub.f32 %v295, %v303
    %v305 = vsub.f32 %v296, %v303
    %v306 = vsub.f32 %v297, %v303
    %v307 = vsub.f32 %v298, %v303
    %v308 = vmax.f32 %v299, %v304
    %v309 = vmax.f32 %v300, %v305
    %v310 = vmax.f32 %v301, %v306
    %v311 = vmax.f32 %v302, %v307
    %v312 = vmax.f32 %v308, 0.0
    %v313 = vmax.f32 %v309, 0.0
    %v314 = vmax.f32 %v310, 0.0
    %v315 = vmax.f32 %v311, 0.0
    %v316 = vmul.f32 %v276, %v290
    %v317 = vmul.f32 %v277, %v290
    %v318 = vmul.f32 %v278, %v290
    %v319 = vmul.f32 %v279, %v290
    %v320 = vmul.f32 %v281, %v285
    %v321 = vmul.f32 %v282, %v285
    %v322 = vmul.f32 %v283, %v285
    %v323 = vmul.f32 %v284, %v285
    %v324 = vsub.f32 %v316, %v320
    %v325 = vsub.f32 %v317, %v321
    %v326 = vsub.f32 %v318, %v322
    %v327 = vsub.f32 %v319, %v323
    %v328 = vmul.f32 %v312, %v312
    %v329 = vmul.f32 %v313, %v313
    %v330 = vmul.f32 %v314, %v314
    %v331 = vmul.f32 %v315, %v315
    %v332 = vmul.f32 %v324, %v324
    %v333 = vmul.f32 %v325, %v325
    %v334 = vmul.f32 %v326, %v326
    %v335 = vmul.f32 %v327, %v327
    %v336 = vadd.f32 %v328, %v332
    %v337 = vadd.f32 %v329, %v333
    %v338 = vadd.f32 %v330, %v334
    %v339 = vadd.f32 %v331, %v335
    %v340 = vstv %s274
    %v341 = vmul.f32 %v336, %v340
    %v342 = vmul.f32 %v337, %v340
    %v343 = vmul.f32 %v338, %v340
    %v344 = vmul.f32 %v339, %v340
    %v345 = vmin.f32 %v265, %v341
    %v346 = vmin.f32 %v266, %v342
    %v347 = vmin.f32 %v267, %v343
    %v348 = vmin.f32 %v268, %v344
    %s349 = sld [smem:[#allocation2 + $0x18]]
    %s350 = sld [smem:[#allocation2 + $0x19]]
    %s351 = sld [smem:[#allocation2 + $0x1a]]
    %s352 = sld [smem:[#allocation2 + $0x1b]]
    %s353 = sld [smem:[#allocation2 + $0x1c]]
    %s354 = sld [smem:[#allocation2 + $0x1d]]
    %v355 = vstv %s349
    %v356 = vsub.f32 %v24, %v355
    %v357 = vsub.f32 %v25, %v355
    %v358 = vsub.f32 %v26, %v355
    %v359 = vsub.f32 %v27, %v355
    %v360 = vstv %s350
    %v361 = vsub.f32 %v29, %v360
    %v362 = vsub.f32 %v30, %v360
    %v363 = vsub.f32 %v31, %v360
    %v364 = vsub.f32 %v32, %v360
    %v365 = vstv %s351
    %v366 = vmul.f32 %v356, %v365
    %v367 = vmul.f32 %v357, %v365
    %v368 = vmul.f32 %v358, %v365
    %v369 = vmul.f32 %v359, %v365
    %v370 = vstv %s352
    %v371 = vmul.f32 %v361, %v370
    %v372 = vmul.f32 %v362, %v370
    %v373 = vmul.f32 %v363, %v370
    %v374 = vmul.f32 %v364, %v370
    %v375 = vadd.f32 %v366, %v371
    %v376 = vadd.f32 %v367, %v372
    %v377 = vadd.f32 %v368, %v373
    %v378 = vadd.f32 %v369, %v374
    %v379 = vsub.f32 0.0, %v375
    %v380 = vsub.f32 0.0, %v376
    %v381 = vsub.f32 0.0, %v377
    %v382 = vsub.f32 0.0, %v378
    %v383 = vstv %s353
    %v384 = vsub.f32 %v375, %v383
    %v385 = vsub.f32 %v376, %v383
    %v386 = vsub.f32 %v377, %v383
    %v387 = vsub.f32 %v378, %v383
    %v388 = vmax.f32 %v379, %v384
    %v389 = vmax.f32 %v380, %v385
    %v390 = vmax.f32 %v381, %v386
    %v391 = vmax.f32 %v382, %v387
    %v392 = vmax.f32 %v388, 0.0
    %v393 = vmax.f32 %v389, 0.0
    %v394 = vmax.f32 %v390, 0.0
    %v395 = vmax.f32 %v391, 0.0
    %v396 = vmul.f32 %v356, %v370
    %v397 = vmul.f32 %v357, %v370
    %v398 = vmul.f32 %v358, %v370
    %v399 = vmul.f32 %v359, %v370
    %v400 = vmul.f32 %v361, %v365
    %v401 = vmul.f32 %v362, %v365
    %v402 = vmul.f32 %v363, %v365
    %v403 = vmul.f32 %v364, %v365
    %v404 = vsub.f32 %v396, %v400
    %v405 = vsub.f32 %v397, %v401
    %v406 = vsub.f32 %v398, %v402
    %v407 = vsub.f32 %v399, %v403
    %v408 = vmul.f32 %v392, %v392
    %v409 = vmul.f32 %v393, %v393
    %v410 = vmul.f32 %v394, %v394
    %v411 = vmul.f32 %v395, %v395
    %v412 = vmul.f32 %v404, %v404
    %v413 = vmul.f32 %v405, %v405
    %v414 = vmul.f32 %v406, %v406
    %v415 = vmul.f32 %v407, %v407
    %v416 = vadd.f32 %v408, %v412
    %v417 = vadd.f32 %v409, %v413
    %v418 = vadd.f32 %v410, %v414
    %v419 = vadd.f32 %v411, %v415
    %v420 = vstv %s354
    %v421 = vmul.f32 %v416, %v420
    %v422 = vmul.f32 %v417, %v420
    %v423 = vmul.f32 %v418, %v420
    %v424 = vmul.f32 %v419, %v420
    %v425 = vmin.f32 %v345, %v421
    %v426 = vmin.f32 %v346, %v422
    %v427 = vmin.f32 %v347, %v423
    %v428 = vmin.f32 %v348, %v424
    %s429 = sld [smem:[#allocation2 + $0x1e]]
    %s430 = sld [smem:[#allocation2 + $0x1f]]
    %s431 = sld [smem:[#allocation2 + $0x20]]
    %s432 = sld [smem:[#allocation2 + $0x21]]
    %s433 = sld [smem:[#allocation2 + $0x22]]
    %s434 = sld [smem:[#allocation2 + $0x23]]
    %v435 = vstv %s429
    %v436 = vsub.f32 %v24, %v435
    %v437 = vsub.f32 %v25, %v435
    %v438 = vsub.f32 %v26, %v435
    %v439 = vsub.f32 %v27, %v435
    %v440 = vstv %s430
    %v441 = vsub.f32 %v29, %v440
    %v442 = vsub.f32 %v30, %v440
    %v443 = vsub.f32 %v31, %v440
    %v444 = vsub.f32 %v32, %v440
    %v445 = vstv %s431
    %v446 = vmul.f32 %v436, %v445
    %v447 = vmul.f32 %v437, %v445
    %v448 = vmul.f32 %v438, %v445
    %v449 = vmul.f32 %v439, %v445
    %v450 = vstv %s432
    %v451 = vmul.f32 %v441, %v450
    %v452 = vmul.f32 %v442, %v450
    %v453 = vmul.f32 %v443, %v450
    %v454 = vmul.f32 %v444, %v450
    %v455 = vadd.f32 %v446, %v451
    %v456 = vadd.f32 %v447, %v452
    %v457 = vadd.f32 %v448, %v453
    %v458 = vadd.f32 %v449, %v454
    %v459 = vsub.f32 0.0, %v455
    %v460 = vsub.f32 0.0, %v456
    %v461 = vsub.f32 0.0, %v457
    %v462 = vsub.f32 0.0, %v458
    %v463 = vstv %s433
    %v464 = vsub.f32 %v455, %v463
    %v465 = vsub.f32 %v456, %v463
    %v466 = vsub.f32 %v457, %v463
    %v467 = vsub.f32 %v458, %v463
    %v468 = vmax.f32 %v459, %v464
    %v469 = vmax.f32 %v460, %v465
    %v470 = vmax.f32 %v461, %v466
    %v471 = vmax.f32 %v462, %v467
    %v472 = vmax.f32 %v468, 0.0
    %v473 = vmax.f32 %v469, 0.0
    %v474 = vmax.f32 %v470, 0.0
    %v475 = vmax.f32 %v471, 0.0
    %v476 = vmul.f32 %v436, %v450
    %v477 = vmul.f32 %v437, %v450
    %v478 = vmul.f32 %v438, %v450
    %v479 = vmul.f32 %v439, %v450
    %v480 = vmul.f32 %v441, %v445
    %v481 = vmul.f32 %v442, %v445
    %v482 = vmul.f32 %v443, %v445
    %v483 = vmul.f32 %v444, %v445
    %v484 = vsub.f32 %v476, %v480
    %v485 = vsub.f32 %v477, %v481
    %v486 = vsub.f32 %v478, %v482
    %v487 = vsub.f32 %v479, %v483
    %v488 = vmul.f32 %v472, %v472
    %v489 = vmul.f32 %v473, %v473
    %v490 = vmul.f32 %v474, %v474
    %v491 = vmul.f32 %v475, %v475
    %v492 = vmul.f32 %v484, %v484
    %v493 = vmul.f32 %v485, %v485
    %v494 = vmul.f32 %v486, %v486
    %v495 = vmul.f32 %v487, %v487
    %v496 = vadd.f32 %v488, %v492
    %v497 = vadd.f32 %v489, %v493
    %v498 = vadd.f32 %v490, %v494
    %v499 = vadd.f32 %v491, %v495
    %v500 = vstv %s434
    %v501 = vmul.f32 %v496, %v500
    %v502 = vmul.f32 %v497, %v500
    %v503 = vmul.f32 %v498, %v500
    %v504 = vmul.f32 %v499, %v500
    %v505 = vmin.f32 %v425, %v501
    %v506 = vmin.f32 %v426, %v502
    %v507 = vmin.f32 %v427, %v503
    %v508 = vmin.f32 %v428, %v504
    %v509 = vadd.f32 %v505, %v506
    %v510 = vadd.f32 %v509, %v507
    %v511 = vadd.f32 %v510, %v508
    %v512 = vadd.f32 %v511, 0.0
    %513 = vst [vmem:[%s2] sm:$0xff] %v512
    // Predicated region
    $region14: #{nearest_segment_distance_pallas.1} parent=1 // pred_check
      _
    $region15: #{nearest_segment_distance_pallas.1} parent=1 // pred_check_branch
      %515 = sbr.rel (0) target = $region17
    $region16: #{nearest_segment_distance_pallas.1} parent=1 // pred_region
      _
    $region17: #{nearest_segment_distance_pallas.1} parent=1 // pred_fallthru
      _
    // Predicated region
    $region18: #{nearest_segment_distance_pallas.1} parent=1 // pred_check
      _
    $region19: #{nearest_segment_distance_pallas.1} parent=1 // pred_check_branch
      %517 = sbr.rel (0) target = $region21
    $region20: #{nearest_segment_distance_pallas.1} parent=1 // pred_region
      _
    $region21: #{nearest_segment_distance_pallas.1} parent=1 // pred_fallthru
      _
    %518 = vsyncpa [#allocation3], 1

</llo_original>
